<compile_context>
chip_gen: v7x
topology: tpu7x:2x2x1
jax: 0.10.0
libtpu: 0.0.40
codegen_flags: <defaults>
</compile_context>

<pallas_src>
import functools

import jax
import jax.numpy as jnp
from jax.experimental import pallas as pl
from jax.experimental.pallas import tpu as pltpu

LANE = 128                        # channel padding (vreg lane width)
VMEM_LIMIT = 48 * 1024 * 1024     # < 64 MiB physical on v7x, > scoped defaults on v5e/v6e


# ---------------------------------------------------------------------------
# Pallas kernel: one tiled GCN layer   out = A_hat @ (X @ W) + b   (optional ReLU)
# Grid = (row_tiles [parallel], k_tiles [arbitrary reduction over nodes]).
# ---------------------------------------------------------------------------
def _gcn_layer_kernel(a_ref, x_ref, w_ref, b_ref, o_ref, acc_ref, *, apply_relu):
    # a_ref: (TILE_M, TILE_K) bf16  — streamed A_hat tile
    # x_ref: (TILE_K, C)      bf16  — streamed node-feature tile for this k
    # w_ref: (C, C)           bf16  — resident weights
    # b_ref: (1, C)           f32   — resident bias
    # acc_ref: (TILE_M, C)    f32   — VMEM accumulator across the k axis
    k = pl.program_id(1)

    @pl.when(k == 0)
    def _():
        acc_ref[...] = jnp.zeros_like(acc_ref)

    # X_k @ W on the MXU (bf16 operands, f32 accumulation), then aggregate with the A tile.
    xw = jnp.dot(x_ref[...], w_ref[...], preferred_element_type=jnp.float32)
    acc_ref[...] += jnp.dot(a_ref[...], xw.astype(jnp.bfloat16),
                            preferred_element_type=jnp.float32)

    @pl.when(k == pl.num_programs(1) - 1)
    def _():
        out = acc_ref[...] + b_ref[...]              # f32 epilogue
        if apply_relu:
            out = jnp.maximum(out, 0.0)
        o_ref[...] = out.astype(o_ref.dtype)         # lane-dense store (C = 128)


def gcn_layer(a_hat, x, w, b, *, apply_relu, out_dtype, tile_m, tile_k):
    n_pad = a_hat.shape[0]
    c_pad = w.shape[1]
    grid = (n_pad // tile_m, n_pad // tile_k)
    kernel = functools.partial(_gcn_layer_kernel, apply_relu=apply_relu)
    return pl.pallas_call(
        kernel,
        out_shape=jax.ShapeDtypeStruct((n_pad, c_pad), out_dtype),
        grid_spec=pltpu.PrefetchScalarGridSpec(
            num_scalar_prefetch=0,
            grid=grid,
            in_specs=[
                pl.BlockSpec((tile_m, tile_k), lambda i, k: (i, k)),   # A streams (rows, k)
                pl.BlockSpec((tile_k, c_pad), lambda i, k: (k, 0)),    # X streams over k
                pl.BlockSpec((c_pad, c_pad), lambda i, k: (0, 0)),     # W resident in VMEM
                pl.BlockSpec((1, c_pad), lambda i, k: (0, 0)),         # b resident in VMEM
            ],
            out_specs=pl.BlockSpec((tile_m, c_pad), lambda i, k: (i, 0)),
            scratch_shapes=[pltpu.VMEM((tile_m, c_pad), jnp.float32)],
        ),
        compiler_params=pltpu.CompilerParams(
            dimension_semantics=("parallel", "arbitrary"),   # rows across TCs, k is reduction
            vmem_limit_bytes=VMEM_LIMIT,
        ),
    )(a_hat, x, w, b)


# ---------------------------------------------------------------------------
# Glue (plain JAX, fused under jit): features, normalized adjacency, padding
# ---------------------------------------------------------------------------
def build_node_features(featr3, stmdist):
    # featr3: [N, 3, 3, 3]; stmdist: [N, 1]
    rows = jnp.array([0, 0, 0, 1, 1, 2])
    cols = jnp.array([0, 1, 2, 1, 2, 2])
    t0 = featr3[:, 0][:, rows, cols]            # [N, 6] upper-tri of 1st 3x3
    t1 = featr3[:, 1][:, rows, cols]            # [N, 6] upper-tri of 2nd 3x3
    t2 = featr3[:, 2].reshape(-1, 9)            # [N, 9] flattened 3rd 3x3
    return jnp.concatenate([t0, t1, t2, stmdist], axis=1)  # [N, 22]


def build_norm_adj(edge_index, num_nodes, improved=False):
    # torch_geometric gcn_norm: add self loops (1, or 2 if improved), D^-1/2 (A+I) D^-1/2.
    # TODO(synk): at real mesh sizes replace this dense O(N^2) adjacency with a sparse CSR
    # gather + segment-sum aggregation kernel (PrefetchScalarGridSpec / manual DMA gather).
    src = edge_index[0]
    dst = edge_index[1]
    adj = jnp.zeros((num_nodes, num_nodes), jnp.float32)
    adj = adj.at[dst, src].add(1.0)                       # A[i, j] = edge j -> i
    fill = 2.0 if improved else 1.0
    adj = adj + fill * jnp.eye(num_nodes, dtype=jnp.float32)
    deg = adj.sum(axis=1)
    dinv = jnp.where(deg > 0, jax.lax.rsqrt(deg), 0.0)
    return adj * dinv[:, None] * dinv[None, :]


def _pad2(a, rows, cols, dtype=None):
    """Zero-pad a 2-D array to (rows, cols), optionally casting."""
    out = jnp.pad(a, ((0, rows - a.shape[0]), (0, cols - a.shape[1])))
    return out if dtype is None else out.astype(dtype)


def init_params(key, in_channels, hidden_channels, out_channels, num_layers):
    channels = [in_channels] + [hidden_channels] * (num_layers - 1) + [out_channels]
    params = []
    for i in range(num_layers):
        key, wk = jax.random.split(key)
        fan_in, fan_out = channels[i], channels[i + 1]
        limit = (6.0 / (fan_in + fan_out)) ** 0.5          # glorot uniform
        w = jax.random.uniform(wk, (fan_in, fan_out), jnp.float32, -limit, limit)
        b = jnp.zeros((1, fan_out), jnp.float32)           # GCNConv bias init = zeros
        params.append((w, b))
    return params


@jax.jit
def mesh_gcn_forward(params, featr3, stmdist, edge_index):
    n = featr3.shape[0]
    out_channels = params[-1][0].shape[1]

    x = build_node_features(featr3, stmdist)               # data.x, [N, 22]
    a_hat = build_norm_adj(edge_index, n)                  # [N, N]

    # Only convs[-2] (last hidden) and convs[-1] (output) influence the result
    # (reference-forward quirk; see header).  Dead layers are skipped — identical output.
    wh, bh = params[-2]
    wo, bo = params[-1]
    # Guard against channel-count mismatches before padding hides them.
    assert wh.shape[0] == x.shape[1], (wh.shape, x.shape)
    assert wo.shape[0] == wh.shape[1], (wo.shape, wh.shape)

    # Tile / padding choices:
    #  * node dim padded to a multiple of TILE (itself a multiple of 128) -> lane-dense A tiles.
    #  * 256 tiles match the v6e/v7x 256x256 MXU; 128 is enough for tiny meshes.
    #    TODO(synk): pick 128 tiles on v5e (4x 128x128 MXU) via pltpu.get_tpu_info().
    tile = 128 if n <= 128 else 256
    n_pad = ((n + tile - 1) // tile) * tile

    # bf16 matmul operands (native MXU rate, half the VMEM/HBM bytes); accumulation stays f32.
    a_pad = _pad2(a_hat, n_pad, n_pad, jnp.bfloat16)
    x_pad = _pad2(x, n_pad, LANE, jnp.bfloat16)
    wh_p = _pad2(wh, LANE, LANE, jnp.bfloat16)
    wo_p = _pad2(wo, LANE, LANE, jnp.bfloat16)
    bh_p = _pad2(bh, 1, LANE)                              # f32
    bo_p = _pad2(bo, 1, LANE)                              # f32

    # convs[-2]: h = relu(A_hat @ (x @ Wh) + bh)   (hidden kept bf16: feeds next layer's MXU)
    h = gcn_layer(a_pad, x_pad, wh_p, bh_p, apply_relu=True,
                  out_dtype=jnp.bfloat16, tile_m=tile, tile_k=tile)
    # convs[-1]: o = A_hat @ (h @ Wo) + bo
    o = gcn_layer(a_pad, h, wo_p, bo_p, apply_relu=False,
                  out_dtype=jnp.float32, tile_m=tile, tile_k=tile)

    # TODO(synk): for the tiny-N regime, batch many meshes (block-diagonal A) into one call
    # to amortize launch/DMA latency.
    return o[:n, :out_channels]


# ---------------------------------------------------------------------------
if __name__ == "__main__":
    N = 16                       # number of mesh nodes
    IN_C = 22                    # 6 + 6 + 9 + 1 (from feature construction)
    HID_C = 22                   # must equal IN_C due to the reference forward()
    OUT_C = 4
    NUM_LAYERS = 6

    key = jax.random.PRNGKey(0)
    k1, k2, k3 = jax.random.split(key, 3)

    featr3 = jax.random.normal(k1, (N, 3, 3, 3), jnp.float32)
    stmdist = jax.random.normal(k2, (N, 1), jnp.float32)

    # Deterministic undirected ring graph (both directions), no self loops.
    src = jnp.arange(N, dtype=jnp.int32)
    dst = (src + 1) % N
    edge_index = jnp.stack(
        [jnp.concatenate([src, dst]), jnp.concatenate([dst, src])], axis=0
    )  # [2, 2N]

    params = init_params(k3, IN_C, HID_C, OUT_C, NUM_LAYERS)

    out = mesh_gcn_forward(params, featr3, stmdist, edge_index)
    out = jax.block_until_ready(out)

    assert out.shape == (N, OUT_C), out.shape
    assert jnp.all(jnp.isfinite(out))
    print("KERNEL_OK")
</pallas_src>

<mosaic_0001>
module attributes {stable_mosaic.version = 11 : i64} {
  func.func private @main(%arg0: i32) attributes {dimension_semantics = [#tpu.dimension_semantics<core_parallel>], iteration_bounds = array<i64: 2>, tpu.core_type = #tpu.core_type<sc_scalar_subcore>, window_params = []} {
    return
  }
}

module attributes {stable_mosaic.version = 11 : i64} {
  func.func private @main(%arg0: i32) attributes {dimension_semantics = [#tpu.dimension_semantics<core_parallel>], iteration_bounds = array<i64: 2>, tpu.core_type = #tpu.core_type<sc_scalar_subcore>, window_params = []} {
    return
  }
}

module attributes {stable_mosaic.version = 11 : i64} {
  func.func @_gcn_layer_kernel(%arg0: i32, %arg1: i32, %arg2: memref<128x128xbf16, #tpu.memory_space<vmem>>, %arg3: memref<128x128xbf16, #tpu.memory_space<vmem>>, %arg4: memref<128x128xbf16, #tpu.memory_space<vmem>>, %arg5: memref<1x128xf32, #tpu.memory_space<vmem>>, %arg6: memref<128x128xf32, #tpu.memory_space<vmem>>, %arg7: memref<128x128xf32, #tpu.memory_space<vmem>>) attributes {dimension_semantics = [#tpu.dimension_semantics<parallel>, #tpu.dimension_semantics<arbitrary>], iteration_bounds = array<i64: 1, 1>, scalar_prefetch = 0 : i64, scratch_operands = 1 : i64, tpu.core_type = #tpu.core_type<tc>, window_params = [{transform_indices = @transform_0, window_bounds = array<i64: 128, 128>}, {transform_indices = @transform_1, window_bounds = array<i64: 128, 128>}, {pipeline_mode = #tpu.pipeline_mode<synchronous>, transform_indices = @transform_2, window_bounds = array<i64: 128, 128>}, {pipeline_mode = #tpu.pipeline_mode<synchronous>, transform_indices = @transform_3, window_bounds = array<i64: 1, 128>}, {transform_indices = @transform_4, window_bounds = array<i64: 128, 128>}]} {
    %c0_i32 = arith.constant 0 : i32
    %0 = arith.cmpi eq, %arg1, %c0_i32 : i32
    %1 = arith.extui %0 : i1 to i32
    %c0_i32_0 = arith.constant 0 : i32
    %2 = arith.cmpi ne, %1, %c0_i32_0 : i32
    scf.if %2 {
      %cst_13 = arith.constant 0.000000e+00 : f32
      %15 = vector.broadcast %cst_13 : f32 to vector<128x128xf32>
      %c0_14 = arith.constant 0 : index
      %c0_15 = arith.constant 0 : index
      %16 = vector.load %arg7[%c0_14, %c0_15] : memref<128x128xf32, #tpu.memory_space<vmem>>, vector<128x128xf32>
      tpu.vector_store %arg7[%c0_14, %c0_15], %15 {strides = array<i32>} : memref<128x128xf32, #tpu.memory_space<vmem>>, vector<128x128xf32>,
    } else {
    }
    %c0 = arith.constant 0 : index
    %c0_1 = arith.constant 0 : index
    %3 = vector.load %arg3[%c0, %c0_1] : memref<128x128xbf16, #tpu.memory_space<vmem>>, vector<128x128xbf16>
    %c0_2 = arith.constant 0 : index
    %c0_3 = arith.constant 0 : index
    %4 = vector.load %arg4[%c0_2, %c0_3] : memref<128x128xbf16, #tpu.memory_space<vmem>>, vector<128x128xbf16>
    %cst = arith.constant dense<0.000000e+00> : vector<128x128xf32>
    %5 = tpu.matmul %3, %4, %cst {dimension_numbers = #tpu.dot_dimension_numbers<[1], [0], [0], [1], [0, 0, 1, 1], [], []>} : vector<128x128xbf16>, vector<128x128xbf16>, vector<128x128xf32> -> vector<128x128xf32>
    %c0_4 = arith.constant 0 : index
    %c0_5 = arith.constant 0 : index
    %6 = vector.load %arg7[%c0_4, %c0_5] : memref<128x128xf32, #tpu.memory_space<vmem>>, vector<128x128xf32>
    %c0_6 = arith.constant 0 : index
    %c0_7 = arith.constant 0 : index
    %7 = vector.load %arg2[%c0_6, %c0_7] : memref<128x128xbf16, #tpu.memory_space<vmem>>, vector<128x128xbf16>
    %8 = arith.truncf %5 : vector<128x128xf32> to vector<128x128xbf16>
    %cst_8 = arith.constant dense<0.000000e+00> : vector<128x128xf32>
    %9 = tpu.matmul %7, %8, %cst_8 {dimension_numbers = #tpu.dot_dimension_numbers<[1], [0], [0], [1], [0, 0, 1, 1], [], []>} : vector<128x128xbf16>, vector<128x128xbf16>, vector<128x128xf32> -> vector<128x128xf32>
    %10 = arith.addf %6, %9 : vector<128x128xf32>
    %c0_9 = arith.constant 0 : index
    %c0_10 = arith.constant 0 : index
    %11 = vector.load %arg7[%c0_9, %c0_10] : memref<128x128xf32, #tpu.memory_space<vmem>>, vector<128x128xf32>
    tpu.vector_store %arg7[%c0_9, %c0_10], %10 {strides = array<i32>} : memref<128x128xf32, #tpu.memory_space<vmem>>, vector<128x128xf32>,
    %c0_i32_11 = arith.constant 0 : i32
    %12 = arith.cmpi eq, %arg1, %c0_i32_11 : i32
    %13 = arith.extui %12 : i1 to i32
    %c0_i32_12 = arith.constant 0 : i32
    %14 = arith.cmpi ne, %13, %c0_i32_12 : i32
    scf.if %14 {
      %c0_13 = arith.constant 0 : index
      %c0_14 = arith.constant 0 : index
      %15 = vector.load %arg7[%c0_13, %c0_14] : memref<128x128xf32, #tpu.memory_space<vmem>>, vector<128x128xf32>
      %c0_15 = arith.constant 0 : index
      %c0_16 = arith.constant 0 : index
      %16 = vector.load %arg5[%c0_15, %c0_16] : memref<1x128xf32, #tpu.memory_space<vmem>>, vector<1x128xf32>
      %17 = vector.broadcast %16 : vector<1x128xf32> to vector<128x128xf32>
      %18 = arith.addf %15, %17 : vector<128x128xf32>
      %c0_17 = arith.constant 0 : index
      %c0_18 = arith.constant 0 : index
      %19 = vector.load %arg6[%c0_17, %c0_18] : memref<128x128xf32, #tpu.memory_space<vmem>>, vector<128x128xf32>
      tpu.vector_store %arg6[%c0_17, %c0_18], %18 {strides = array<i32>} : memref<128x128xf32, #tpu.memory_space<vmem>>, vector<128x128xf32>,
    } else {
    }
    return
  }
  func.func @transform_0(%arg0: i32, %arg1: i32) -> (i32, i32) {
    %c0_i32 = arith.constant 0 : i32
    return %arg0, %arg1 : i32, i32
  }
  func.func @transform_1(%arg0: i32, %arg1: i32) -> (i32, i32) {
    %c0_i32 = arith.constant 0 : i32
    %c0_i32_0 = arith.constant 0 : i32
    return %arg1, %c0_i32 : i32, i32
  }
  func.func @transform_2(%arg0: i32, %arg1: i32) -> (i32, i32) {
    %c0_i32 = arith.constant 0 : i32
    %c0_i32_0 = arith.constant 0 : i32
    %c0_i32_1 = arith.constant 0 : i32
    return %c0_i32, %c0_i32_0 : i32, i32
  }
  func.func @transform_3(%arg0: i32, %arg1: i32) -> (i32, i32) {
    %c0_i32 = arith.constant 0 : i32
    %c0_i32_0 = arith.constant 0 : i32
    %c0_i32_1 = arith.constant 0 : i32
    return %c0_i32, %c0_i32_0 : i32, i32
  }
  func.func @transform_4(%arg0: i32, %arg1: i32) -> (i32, i32) {
    %c0_i32 = arith.constant 0 : i32
    %c0_i32_0 = arith.constant 0 : i32
    return %arg0, %c0_i32 : i32, i32
  }
}

module attributes {stable_mosaic.version = 11 : i64} {
  func.func @_gcn_layer_kernel(%arg0: i32, %arg1: i32, %arg2: memref<128x128xbf16, #tpu.memory_space<vmem>>, %arg3: memref<128x128xbf16, #tpu.memory_space<vmem>>, %arg4: memref<128x128xbf16, #tpu.memory_space<vmem>>, %arg5: memref<1x128xf32, #tpu.memory_space<vmem>>, %arg6: memref<128x128xbf16, #tpu.memory_space<vmem>>, %arg7: memref<128x128xf32, #tpu.memory_space<vmem>>) attributes {dimension_semantics = [#tpu.dimension_semantics<parallel>, #tpu.dimension_semantics<arbitrary>], iteration_bounds = array<i64: 1, 1>, scalar_prefetch = 0 : i64, scratch_operands = 1 : i64, tpu.core_type = #tpu.core_type<tc>, window_params = [{transform_indices = @transform_0, window_bounds = array<i64: 128, 128>}, {transform_indices = @transform_1, window_bounds = array<i64: 128, 128>}, {pipeline_mode = #tpu.pipeline_mode<synchronous>, transform_indices = @transform_2, window_bounds = array<i64: 128, 128>}, {pipeline_mode = #tpu.pipeline_mode<synchronous>, transform_indices = @transform_3, window_bounds = array<i64: 1, 128>}, {transform_indices = @transform_4, window_bounds = array<i64: 128, 128>}]} {
    %c0_i32 = arith.constant 0 : i32
    %0 = arith.cmpi eq, %arg1, %c0_i32 : i32
    %1 = arith.extui %0 : i1 to i32
    %c0_i32_0 = arith.constant 0 : i32
    %2 = arith.cmpi ne, %1, %c0_i32_0 : i32
    scf.if %2 {
      %cst_13 = arith.constant 0.000000e+00 : f32
      %15 = vector.broadcast %cst_13 : f32 to vector<128x128xf32>
      %c0_14 = arith.constant 0 : index
      %c0_15 = arith.constant 0 : index
      %16 = vector.load %arg7[%c0_14, %c0_15] : memref<128x128xf32, #tpu.memory_space<vmem>>, vector<128x128xf32>
      tpu.vector_store %arg7[%c0_14, %c0_15], %15 {strides = array<i32>} : memref<128x128xf32, #tpu.memory_space<vmem>>, vector<128x128xf32>,
    } else {
    }
    %c0 = arith.constant 0 : index
    %c0_1 = arith.constant 0 : index
    %3 = vector.load %arg3[%c0, %c0_1] : memref<128x128xbf16, #tpu.memory_space<vmem>>, vector<128x128xbf16>
    %c0_2 = arith.constant 0 : index
    %c0_3 = arith.constant 0 : index
    %4 = vector.load %arg4[%c0_2, %c0_3] : memref<128x128xbf16, #tpu.memory_space<vmem>>, vector<128x128xbf16>
    %cst = arith.constant dense<0.000000e+00> : vector<128x128xf32>
    %5 = tpu.matmul %3, %4, %cst {dimension_numbers = #tpu.dot_dimension_numbers<[1], [0], [0], [1], [0, 0, 1, 1], [], []>} : vector<128x128xbf16>, vector<128x128xbf16>, vector<128x128xf32> -> vector<128x128xf32>
    %c0_4 = arith.constant 0 : index
    %c0_5 = arith.constant 0 : index
    %6 = vector.load %arg7[%c0_4, %c0_5] : memref<128x128xf32, #tpu.memory_space<vmem>>, vector<128x128xf32>
    %c0_6 = arith.constant 0 : index
    %c0_7 = arith.constant 0 : index
    %7 = vector.load %arg2[%c0_6, %c0_7] : memref<128x128xbf16, #tpu.memory_space<vmem>>, vector<128x128xbf16>
    %8 = arith.truncf %5 : vector<128x128xf32> to vector<128x128xbf16>
    %cst_8 = arith.constant dense<0.000000e+00> : vector<128x128xf32>
    %9 = tpu.matmul %7, %8, %cst_8 {dimension_numbers = #tpu.dot_dimension_numbers<[1], [0], [0], [1], [0, 0, 1, 1], [], []>} : vector<128x128xbf16>, vector<128x128xbf16>, vector<128x128xf32> -> vector<128x128xf32>
    %10 = arith.addf %6, %9 : vector<128x128xf32>
    %c0_9 = arith.constant 0 : index
    %c0_10 = arith.constant 0 : index
    %11 = vector.load %arg7[%c0_9, %c0_10] : memref<128x128xf32, #tpu.memory_space<vmem>>, vector<128x128xf32>
    tpu.vector_store %arg7[%c0_9, %c0_10], %10 {strides = array<i32>} : memref<128x128xf32, #tpu.memory_space<vmem>>, vector<128x128xf32>,
    %c0_i32_11 = arith.constant 0 : i32
    %12 = arith.cmpi eq, %arg1, %c0_i32_11 : i32
    %13 = arith.extui %12 : i1 to i32
    %c0_i32_12 = arith.constant 0 : i32
    %14 = arith.cmpi ne, %13, %c0_i32_12 : i32
    scf.if %14 {
      %c0_13 = arith.constant 0 : index
      %c0_14 = arith.constant 0 : index
      %15 = vector.load %arg7[%c0_13, %c0_14] : memref<128x128xf32, #tpu.memory_space<vmem>>, vector<128x128xf32>
      %c0_15 = arith.constant 0 : index
      %c0_16 = arith.constant 0 : index
      %16 = vector.load %arg5[%c0_15, %c0_16] : memref<1x128xf32, #tpu.memory_space<vmem>>, vector<1x128xf32>
      %17 = vector.broadcast %16 : vector<1x128xf32> to vector<128x128xf32>
      %18 = arith.addf %15, %17 : vector<128x128xf32>
      %cst_17 = arith.constant 0.000000e+00 : f32
      %19 = vector.broadcast %cst_17 : f32 to vector<128x128xf32>
      %20 = arith.maximumf %18, %19 : vector<128x128xf32>
      %21 = arith.truncf %20 : vector<128x128xf32> to vector<128x128xbf16>
      %c0_18 = arith.constant 0 : index
      %c0_19 = arith.constant 0 : index
      %22 = vector.load %arg6[%c0_18, %c0_19] : memref<128x128xbf16, #tpu.memory_space<vmem>>, vector<128x128xbf16>
      tpu.vector_store %arg6[%c0_18, %c0_19], %21 {strides = array<i32>} : memref<128x128xbf16, #tpu.memory_space<vmem>>, vector<128x128xbf16>,
    } else {
    }
    return
  }
  func.func @transform_0(%arg0: i32, %arg1: i32) -> (i32, i32) {
    %c0_i32 = arith.constant 0 : i32
    return %arg0, %arg1 : i32, i32
  }
  func.func @transform_1(%arg0: i32, %arg1: i32) -> (i32, i32) {
    %c0_i32 = arith.constant 0 : i32
    %c0_i32_0 = arith.constant 0 : i32
    return %arg1, %c0_i32 : i32, i32
  }
  func.func @transform_2(%arg0: i32, %arg1: i32) -> (i32, i32) {
    %c0_i32 = arith.constant 0 : i32
    %c0_i32_0 = arith.constant 0 : i32
    %c0_i32_1 = arith.constant 0 : i32
    return %c0_i32, %c0_i32_0 : i32, i32
  }
  func.func @transform_3(%arg0: i32, %arg1: i32) -> (i32, i32) {
    %c0_i32 = arith.constant 0 : i32
    %c0_i32_0 = arith.constant 0 : i32
    %c0_i32_1 = arith.constant 0 : i32
    return %c0_i32, %c0_i32_0 : i32, i32
  }
  func.func @transform_4(%arg0: i32, %arg1: i32) -> (i32, i32) {
    %c0_i32 = arith.constant 0 : i32
    %c0_i32_0 = arith.constant 0 : i32
    return %arg0, %c0_i32 : i32, i32
  }
}

</mosaic_0001>

<llo_original>
// kernel: squeeze.0
$region0: #{squeeze.0}
  %s0 = inlined_call_operand.vmem [shape: bf16[16,1,3,3], index: 0, kind: input, shape index: {}]
  %s1 = inlined_call_operand.vmem [shape: bf16[16,9], index: 1, kind: output, shape index: {}]
  $region1: #{squeeze.0} parent=0
    #allocation0 [shape = 'u8[8192]{0}', space=vmem, size = 0x2000, scoped, tag = 'scoped mem for output reshape']
    #allocation1 [shape = 'u8[12288]{0}', space=vmem, size = 0x3000, scoped, tag = 'scoped mem for input reshape']
    %s3 = smul.u32 2, 2
    %s4 = sshllo.u32 0, %s3
    %s5 = smul.addr 2, 2
    %s6 = scalar_lea.vmem %s0, %s5
    %s7 = sshrl.u32 %s4, 1
    %s8 = sor.u32 %s4, %s7
    %s9 = sand.u32 %s8, 85
    %s10 = sshrl.u32 %s9, 1
    %s11 = sor.u32 %s9, %s10
    %s12 = sand.u32 51, %s11
    %s13 = sshrl.u32 %s12, 2
    %s14 = sor.u32 %s12, %s13
    %s15 = sand.u32 15, %s14
    %v16 = vld [vmem:[%s6] sm:%s15]
    %v17 = vunpack.c.l.bf16 %v16
    %v18 = vunpack.c.h.bf16 %v16
    %s19 = scalar_lea.vmem [#allocation1], 16
    %20 = vst [vmem:[%s19] sm:%s4] %v17
    %s21 = scalar_lea.vmem %s0, 2
    %s22 = sshrl.u32 %s4, 1
    %s23 = sor.u32 %s4, %s22
    %s24 = sand.u32 %s23, 85
    %s25 = sshrl.u32 %s24, 1
    %s26 = sor.u32 %s24, %s25
    %s27 = sand.u32 51, %s26
    %s28 = sshrl.u32 %s27, 2
    %s29 = sor.u32 %s27, %s28
    %s30 = sand.u32 15, %s29
    %v31 = vld [vmem:[%s21] sm:%s30]
    %v32 = vunpack.c.l.bf16 %v31
    %v33 = vunpack.c.h.bf16 %v31
    %s34 = scalar_lea.vmem [#allocation1], 8
    %35 = vst [vmem:[%s34] sm:%s4] %v32
    %s36 = sshrl.u32 %s4, 1
    %s37 = sor.u32 %s4, %s36
    %s38 = sand.u32 %s37, 85
    %s39 = sshrl.u32 %s38, 1
    %s40 = sor.u32 %s38, %s39
    %s41 = sand.u32 51, %s40
    %s42 = sshrl.u32 %s41, 2
    %s43 = sor.u32 %s41, %s42
    %s44 = sand.u32 15, %s43
    %v45 = vld [vmem:[%s0] sm:%s44]
    %v46 = vunpack.c.l.bf16 %v45
    %v47 = vunpack.c.h.bf16 %v45
    %48 = vst [vmem:[#allocation1] sm:%s4] %v46
    %v49 = vld [vmem:[#allocation1] sm:$0x7]
    %vm50 = vcmask 130048
    %51 = vst.msk [vmem:[#allocation0] sm:$0x7] %vm50, %v49
    %s52 = scalar_lea.vmem [#allocation1], 8
    %v53 = vld [vmem:[%s52] sm:$0x7]
    %vm54 = vcmask 130048
    %s55 = scalar_lea.vmem [#allocation0], 3
    %56 = vst.msk [vmem:[%s55] sm:$0x7] %vm54, %v53
    %s57 = scalar_lea.vmem [#allocation1], 16
    %v58 = vld [vmem:[%s57] sm:$0x7]
    %vm59 = vcmask 130048
    %s60 = scalar_lea.vmem [#allocation0], 6
    %61 = vst.msk [vmem:[%s60] sm:$0x7] %vm59, %v58
    %s63 = smul.u32 4, 2
    %s64 = sshllo.u32 0, %s63
    %s65 = sshrl.u32 %s63, 1
    %v66 = vld [vmem:[#allocation0] sm:%s64]
    %v67 = vpack.c.bf16 0.0, %v66
    %s68 = sshllo.u32 0, %s65
    %69 = vst [vmem:[%s1] sm:%s68] %v67
    %s70 = scalar_lea.vmem [#allocation0], 8
    %v71 = vld [vmem:[%s70] sm:%s64]
    %v72 = vpack.c.bf16 0.0, %v71
    %s73 = sshllo.u32 0, %s65
    %s74 = scalar_lea.vmem %s1, 4
    %75 = vst [vmem:[%s74] sm:%s73] %v72

// kernel: mesh_gcn_forward.3
$region0: #{mesh_gcn_forward.3}
  #allocation0 [shape = 'u32[]', space=smem, size = 0x4, offset = 0x4, fixed_abs, tag = 'smem constant byte address 0x4 - core index']
  #allocation1 [shape = 'u32[144,128]{1,0:T(1,128)}', space=vmem, size = 0x12000, scoped, tag = 'internal scratch']
  #allocation2 [shape = 'f32[128,128]{1,0:T(8,128)}', space=vmem, size = 0x10000, scoped, tag = 'scratch operand']
  %s0 = inlined_call_operand.vmem [shape: bf16[128,128], index: 0, kind: input, shape index: {}]
  %s1 = inlined_call_operand.vmem [shape: bf16[128,128], index: 1, kind: input, shape index: {}]
  %s2 = inlined_call_operand.vmem [shape: bf16[128,128], index: 2, kind: input, shape index: {}]
  %s3 = inlined_call_operand.vmem [shape: f32[1,128], index: 3, kind: input, shape index: {}]
  %s4 = inlined_call_operand.vmem [shape: f32[128,128], index: 4, kind: output, shape index: {}]
  %s5 = sld [smem:[#allocation0]]
  $region34: #{mesh_gcn_forward.3} parent=0
    _
  %s7 = ssub.s32 1, %s5
  %s8 = scalar_select 0, %s7, %s5
  // Predicated region
  $region2: #{mesh_gcn_forward.3} parent=0 // pred_check
    _
  $region3: #{mesh_gcn_forward.3} parent=0 // pred_check_branch
    %10 = sbr.rel (0) target = $region5
  $region4: #{mesh_gcn_forward.3} parent=0 // pred_region
    _
  $region5: #{mesh_gcn_forward.3} parent=0 // pred_fallthru
    _
  // Predicated region
  $region6: #{mesh_gcn_forward.3} parent=0 // pred_check
    _
  $region7: #{mesh_gcn_forward.3} parent=0 // pred_check_branch
    %12 = sbr.rel (0) target = $region9
  $region8: #{mesh_gcn_forward.3} parent=0 // pred_region
    _
  $region9: #{mesh_gcn_forward.3} parent=0 // pred_fallthru
    _
  // Predicated region
  $region10: #{mesh_gcn_forward.3} parent=0 // pred_check
    _
  $region11: #{mesh_gcn_forward.3} parent=0 // pred_check_branch
    %14 = sbr.rel (0) target = $region13
  $region12: #{mesh_gcn_forward.3} parent=0 // pred_region
    _
  $region13: #{mesh_gcn_forward.3} parent=0 // pred_fallthru
    _
  // Predicated region
  $region14: #{mesh_gcn_forward.3} parent=0 // pred_check
    _
  $region15: #{mesh_gcn_forward.3} parent=0 // pred_check_branch
    %16 = sbr.rel (0) target = $region17
  $region16: #{mesh_gcn_forward.3} parent=0 // pred_region
    _
  $region17: #{mesh_gcn_forward.3} parent=0 // pred_fallthru
    _
  %p18 = scmp.eq.s32.totalorder 0, 0
  // Predicated region
  $region18: #{mesh_gcn_forward.3} parent=0 // pred_check
    %p19 = pneg %p18
  $region19: #{mesh_gcn_forward.3} parent=0 // pred_check_branch
    %21 = sbr.rel (%p19) target = $region21
  $region20: #{mesh_gcn_forward.3} parent=0 // pred_region
    %22 = vst [vmem:[#allocation2] sm:$0xff] 0.0
    %23 = vst [vmem:[#allocation2 + $0x8] sm:$0xff] 0.0
    %24 = vst [vmem:[#allocation2 + $0x10] sm:$0xff] 0.0
    %25 = vst [vmem:[#allocation2 + $0x18] sm:$0xff] 0.0
    %26 = vst [vmem:[#allocation2 + $0x20] sm:$0xff] 0.0
    %27 = vst [vmem:[#allocation2 + $0x28] sm:$0xff] 0.0
    %28 = vst [vmem:[#allocation2 + $0x30] sm:$0xff] 0.0
    %29 = vst [vmem:[#allocation2 + $0x38] sm:$0xff] 0.0
    %30 = vst [vmem:[#allocation2 + $0x40] sm:$0xff] 0.0
    %31 = vst [vmem:[#allocation2 + $0x48] sm:$0xff] 0.0
    %32 = vst [vmem:[#allocation2 + $0x50] sm:$0xff] 0.0
    %33 = vst [vmem:[#allocation2 + $0x58] sm:$0xff] 0.0
    %34 = vst [vmem:[#allocation2 + $0x60] sm:$0xff] 0.0
    %35 = vst [vmem:[#allocation2 + $0x68] sm:$0xff] 0.0
    %36 = vst [vmem:[#allocation2 + $0x70] sm:$0xff] 0.0
    %37 = vst [vmem:[#allocation2 + $0x78] sm:$0xff] 0.0
  $region21: #{mesh_gcn_forward.3} parent=0 // pred_fallthru
    _
  %v38 = vld [vmem:[%s1] sm:$0xf]
  %v39 = vld [vmem:[%s1 + $0x4] sm:$0xf]
  %v40 = vld [vmem:[%s1 + $0x8] sm:$0xf]
  %v41 = vld [vmem:[%s1 + $0xc] sm:$0xf]
  %v42 = vld [vmem:[%s1 + $0x10] sm:$0xf]
  %v43 = vld [vmem:[%s1 + $0x14] sm:$0xf]
  %v44 = vld [vmem:[%s1 + $0x18] sm:$0xf]
  %v45 = vld [vmem:[%s1 + $0x1c] sm:$0xf]
  %v46 = vld [vmem:[%s1 + $0x20] sm:$0xf]
  %v47 = vld [vmem:[%s1 + $0x24] sm:$0xf]
  %v48 = vld [vmem:[%s1 + $0x28] sm:$0xf]
  %v49 = vld [vmem:[%s1 + $0x2c] sm:$0xf]
  %v50 = vld [vmem:[%s1 + $0x30] sm:$0xf]
  %v51 = vld [vmem:[%s1 + $0x34] sm:$0xf]
  %v52 = vld [vmem:[%s1 + $0x38] sm:$0xf]
  %v53 = vld [vmem:[%s1 + $0x3c] sm:$0xf]
  %v54 = vld [vmem:[%s2] sm:$0xf]
  %v55 = vld [vmem:[%s2 + $0x4] sm:$0xf]
  %v56 = vld [vmem:[%s2 + $0x8] sm:$0xf]
  %v57 = vld [vmem:[%s2 + $0xc] sm:$0xf]
  %v58 = vld [vmem:[%s2 + $0x10] sm:$0xf]
  %v59 = vld [vmem:[%s2 + $0x14] sm:$0xf]
  %v60 = vld [vmem:[%s2 + $0x18] sm:$0xf]
  %v61 = vld [vmem:[%s2 + $0x1c] sm:$0xf]
  %v62 = vld [vmem:[%s2 + $0x20] sm:$0xf]
  %v63 = vld [vmem:[%s2 + $0x24] sm:$0xf]
  %v64 = vld [vmem:[%s2 + $0x28] sm:$0xf]
  %v65 = vld [vmem:[%s2 + $0x2c] sm:$0xf]
  %v66 = vld [vmem:[%s2 + $0x30] sm:$0xf]
  %v67 = vld [vmem:[%s2 + $0x34] sm:$0xf]
  %v68 = vld [vmem:[%s2 + $0x38] sm:$0xf]
  %v69 = vld [vmem:[%s2 + $0x3c] sm:$0xf]
  %v86 = vunpack.c.l.b16 %v38
  %v87 = vunpack.c.l.b16 %v39
  %v88 = vunpack.c.l.b16 %v40
  %v89 = vunpack.c.l.b16 %v41
  %v90 = vunpack.c.l.b16 %v42
  %v91 = vunpack.c.l.b16 %v43
  %v92 = vunpack.c.l.b16 %v44
  %v93 = vunpack.c.l.b16 %v45
  %v94 = vunpack.c.l.b16 %v46
  %v95 = vunpack.c.l.b16 %v47
  %v96 = vunpack.c.l.b16 %v48
  %v97 = vunpack.c.l.b16 %v49
  %v98 = vunpack.c.l.b16 %v50
  %v99 = vunpack.c.l.b16 %v51
  %v100 = vunpack.c.l.b16 %v52
  %v101 = vunpack.c.l.b16 %v53
  %v102 = vpack.c.b16 %v87, %v86
  %v103 = vpack.c.b16 %v89, %v88
  %v104 = vpack.c.b16 %v91, %v90
  %v105 = vpack.c.b16 %v93, %v92
  %v106 = vpack.c.b16 %v95, %v94
  %v107 = vpack.c.b16 %v97, %v96
  %v108 = vpack.c.b16 %v99, %v98
  %v109 = vpack.c.b16 %v101, %v100
  %v134 = vunpack.c.l.b16 %v54
  %v135 = vunpack.c.l.b16 %v55
  %v136 = vunpack.c.l.b16 %v56
  %v137 = vunpack.c.l.b16 %v57
  %v138 = vunpack.c.l.b16 %v58
  %v139 = vunpack.c.l.b16 %v59
  %v140 = vunpack.c.l.b16 %v60
  %v141 = vunpack.c.l.b16 %v61
  %v142 = vunpack.c.l.b16 %v62
  %v143 = vunpack.c.l.b16 %v63
  %v144 = vunpack.c.l.b16 %v64
  %v145 = vunpack.c.l.b16 %v65
  %v146 = vunpack.c.l.b16 %v66
  %v147 = vunpack.c.l.b16 %v67
  %v148 = vunpack.c.l.b16 %v68
  %v149 = vunpack.c.l.b16 %v69
  %v150 = vpack.c.b16 %v135, %v134
  %v151 = vpack.c.b16 %v137, %v136
  %v152 = vpack.c.b16 %v139, %v138
  %v153 = vpack.c.b16 %v141, %v140
  %v154 = vpack.c.b16 %v143, %v142
  %v155 = vpack.c.b16 %v145, %v144
  %v156 = vpack.c.b16 %v147, %v146
  %v157 = vpack.c.b16 %v149, %v148
  %166 = vmatprep.subr.bf16.mxu0 0
  %167 = vmatpush1.bf16.msra.mxu0 %v150
  %168 = vmatprep.subr.bf16.mxu0 0
  %169 = vmatpush1.bf16.msra.mxu0 %v151
  %170 = vmatprep.subr.bf16.mxu0 0
  %171 = vmatpush1.bf16.msra.mxu0 %v152
  %172 = vmatprep.subr.bf16.mxu0 0
  %173 = vmatpush1.bf16.msra.mxu0 %v153
  %174 = vmatprep.subr.bf16.mxu0 0
  %175 = vmatpush1.bf16.msra.mxu0 %v154
  %176 = vmatprep.subr.bf16.mxu0 0
  %177 = vmatpush1.bf16.msra.mxu0 %v155
  %178 = vmatprep.subr.bf16.mxu0 0
  %179 = vmatpush1.bf16.msra.mxu0 %v156
  %180 = vmatprep.subr.bf16.mxu0 0
  %181 = vmatpush1.bf16.msra.mxu0 %v157
  %182 = vmatprep.subr.bf16.mxu0 0
  %183 = vmatpush1.bf16.msra.mxu0 0
  %184 = vmatprep.subr.bf16.mxu0 0
  %185 = vmatpush1.bf16.msra.mxu0 0
  %186 = vmatprep.subr.bf16.mxu0 0
  %187 = vmatpush1.bf16.msra.mxu0 0
  %188 = vmatprep.subr.bf16.mxu0 0
  %189 = vmatpush1.bf16.msra.mxu0 0
  %190 = vmatprep.subr.bf16.mxu0 0
  %191 = vmatpush1.bf16.msra.mxu0 0
  %192 = vmatprep.subr.bf16.mxu0 0
  %193 = vmatpush1.bf16.msra.mxu0 0
  %194 = vmatprep.subr.bf16.mxu0 0
  %195 = vmatpush1.bf16.msra.mxu0 0
  %196 = vmatprep.subr.bf16.mxu0 0
  %197 = vmatpush1.bf16.msra.mxu0 0
  %198 = vmatprep.mubr.bf16.mxu0 0
  %199 = vmatmul.mubr.bf16.gmra.mrb[0].mxu0 %v102
  %v200 = vpop.f32.mrb[0].mxu0
  %v201 = vadd.f32 0.0, %v200
  %v202 = vpop.f32.mrb[0].mxu0
  %v203 = vpop.f32.mrb[0].mxu0
  %v204 = vadd.f32 0.0, %v203
  %v205 = vpop.f32.mrb[0].mxu0
  %206 = vmatprep.mubr.bf16.mxu0 0
  %207 = vmatmul.mubr.bf16.gmra.mrb[0].mxu0 %v103
  %v208 = vpop.f32.mrb[0].mxu0
  %v209 = vadd.f32 0.0, %v208
  %v210 = vpop.f32.mrb[0].mxu0
  %v211 = vpop.f32.mrb[0].mxu0
  %v212 = vadd.f32 0.0, %v211
  %v213 = vpop.f32.mrb[0].mxu0
  %214 = vmatprep.mubr.bf16.mxu0 0
  %215 = vmatmul.mubr.bf16.gmra.mrb[0].mxu0 %v104
  %v216 = vpop.f32.mrb[0].mxu0
  %v217 = vadd.f32 0.0, %v216
  %v218 = vpop.f32.mrb[0].mxu0
  %v219 = vpop.f32.mrb[0].mxu0
  %v220 = vadd.f32 0.0, %v219
  %v221 = vpop.f32.mrb[0].mxu0
  %222 = vmatprep.mubr.bf16.mxu0 0
  %223 = vmatmul.mubr.bf16.gmra.mrb[0].mxu0 %v105
  %v224 = vpop.f32.mrb[0].mxu0
  %v225 = vadd.f32 0.0, %v224
  %v226 = vpop.f32.mrb[0].mxu0
  %v227 = vpop.f32.mrb[0].mxu0
  %v228 = vadd.f32 0.0, %v227
  %v229 = vpop.f32.mrb[0].mxu0
  %230 = vmatprep.mubr.bf16.mxu0 0
  %231 = vmatmul.mubr.bf16.gmra.mrb[0].mxu0 %v106
  %v232 = vpop.f32.mrb[0].mxu0
  %v233 = vadd.f32 0.0, %v232
  %v234 = vpop.f32.mrb[0].mxu0
  %v235 = vpop.f32.mrb[0].mxu0
  %v236 = vadd.f32 0.0, %v235
  %v237 = vpop.f32.mrb[0].mxu0
  %238 = vmatprep.mubr.bf16.mxu0 0
  %239 = vmatmul.mubr.bf16.gmra.mrb[0].mxu0 %v107
  %v240 = vpop.f32.mrb[0].mxu0
  %v241 = vadd.f32 0.0, %v240
  %v242 = vpop.f32.mrb[0].mxu0
  %v243 = vpop.f32.mrb[0].mxu0
  %v244 = vadd.f32 0.0, %v243
  %v245 = vpop.f32.mrb[0].mxu0
  %246 = vmatprep.mubr.bf16.mxu0 0
  %247 = vmatmul.mubr.bf16.gmra.mrb[0].mxu0 %v108
  %v248 = vpop.f32.mrb[0].mxu0
  %v249 = vadd.f32 0.0, %v248
  %v250 = vpop.f32.mrb[0].mxu0
  %v251 = vpop.f32.mrb[0].mxu0
  %v252 = vadd.f32 0.0, %v251
  %v253 = vpop.f32.mrb[0].mxu0
  %254 = vmatprep.mubr.bf16.mxu0 0
  %255 = vmatmul.mubr.bf16.gmra.mrb[0].mxu0 %v109
  %v256 = vpop.f32.mrb[0].mxu0
  %v257 = vadd.f32 0.0, %v256
  %v258 = vpop.f32.mrb[0].mxu0
  %v259 = vpop.f32.mrb[0].mxu0
  %v260 = vadd.f32 0.0, %v259
  %v261 = vpop.f32.mrb[0].mxu0
  %262 = vdwg.mxu0
  %v263 = vld [vmem:[#allocation2] sm:$0xff]
  %v264 = vld [vmem:[#allocation2 + $0x8] sm:$0xff]
  %v265 = vld [vmem:[#allocation2 + $0x10] sm:$0xff]
  %v266 = vld [vmem:[#allocation2 + $0x18] sm:$0xff]
  %v267 = vld [vmem:[#allocation2 + $0x20] sm:$0xff]
  %v268 = vld [vmem:[#allocation2 + $0x28] sm:$0xff]
  %v269 = vld [vmem:[#allocation2 + $0x30] sm:$0xff]
  %v270 = vld [vmem:[#allocation2 + $0x38] sm:$0xff]
  %v271 = vld [vmem:[#allocation2 + $0x40] sm:$0xff]
  %v272 = vld [vmem:[#allocation2 + $0x48] sm:$0xff]
  %v273 = vld [vmem:[#allocation2 + $0x50] sm:$0xff]
  %v274 = vld [vmem:[#allocation2 + $0x58] sm:$0xff]
  %v275 = vld [vmem:[#allocation2 + $0x60] sm:$0xff]
  %v276 = vld [vmem:[#allocation2 + $0x68] sm:$0xff]
  %v277 = vld [vmem:[#allocation2 + $0x70] sm:$0xff]
  %v278 = vld [vmem:[#allocation2 + $0x78] sm:$0xff]
  %v279 = vld [vmem:[%s0] sm:$0xf]
  %v280 = vld [vmem:[%s0 + $0x4] sm:$0xf]
  %v281 = vld [vmem:[%s0 + $0x8] sm:$0xf]
  %v282 = vld [vmem:[%s0 + $0xc] sm:$0xf]
  %v283 = vld [vmem:[%s0 + $0x10] sm:$0xf]
  %v284 = vld [vmem:[%s0 + $0x14] sm:$0xf]
  %v285 = vld [vmem:[%s0 + $0x18] sm:$0xf]
  %v286 = vld [vmem:[%s0 + $0x1c] sm:$0xf]
  %v287 = vld [vmem:[%s0 + $0x20] sm:$0xf]
  %v288 = vld [vmem:[%s0 + $0x24] sm:$0xf]
  %v289 = vld [vmem:[%s0 + $0x28] sm:$0xf]
  %v290 = vld [vmem:[%s0 + $0x2c] sm:$0xf]
  %v291 = vld [vmem:[%s0 + $0x30] sm:$0xf]
  %v292 = vld [vmem:[%s0 + $0x34] sm:$0xf]
  %v293 = vld [vmem:[%s0 + $0x38] sm:$0xf]
  %v294 = vld [vmem:[%s0 + $0x3c] sm:$0xf]
  %v295 = vpack.c.bf16 %v204, %v201
  %v296 = vpack.c.bf16 %v212, %v209
  %v297 = vpack.c.bf16 %v220, %v217
  %v298 = vpack.c.bf16 %v228, %v225
  %v299 = vpack.c.bf16 %v236, %v233
  %v300 = vpack.c.bf16 %v244, %v241
  %v301 = vpack.c.bf16 %v252, %v249
  %v302 = vpack.c.bf16 %v260, %v257
  %v319 = vunpack.c.l.b16 %v279
  %v320 = vunpack.c.l.b16 %v280
  %v321 = vunpack.c.l.b16 %v281
  %v322 = vunpack.c.l.b16 %v282
  %v323 = vunpack.c.l.b16 %v283
  %v324 = vunpack.c.l.b16 %v284
  %v325 = vunpack.c.l.b16 %v285
  %v326 = vunpack.c.l.b16 %v286
  %v327 = vunpack.c.l.b16 %v287
  %v328 = vunpack.c.l.b16 %v288
  %v329 = vunpack.c.l.b16 %v289
  %v330 = vunpack.c.l.b16 %v290
  %v331 = vunpack.c.l.b16 %v291
  %v332 = vunpack.c.l.b16 %v292
  %v333 = vunpack.c.l.b16 %v293
  %v334 = vunpack.c.l.b16 %v294
  %v335 = vpack.c.b16 %v320, %v319
  %v336 = vpack.c.b16 %v322, %v321
  %v337 = vpack.c.b16 %v324, %v323
  %v338 = vpack.c.b16 %v326, %v325
  %v339 = vpack.c.b16 %v328, %v327
  %v340 = vpack.c.b16 %v330, %v329
  %v341 = vpack.c.b16 %v332, %v331
  %v342 = vpack.c.b16 %v334, %v333
  %351 = vmatprep.subr.bf16.mxu0 0
  %352 = vmatpush1.bf16.msra.mxu0 %v295
  %353 = vmatprep.subr.bf16.mxu0 0
  %354 = vmatpush1.bf16.msra.mxu0 %v296
  %355 = vmatprep.subr.bf16.mxu0 0
  %356 = vmatpush1.bf16.msra.mxu0 %v297
  %357 = vmatprep.subr.bf16.mxu0 0
  %358 = vmatpush1.bf16.msra.mxu0 %v298
  %359 = vmatprep.subr.bf16.mxu0 0
  %360 = vmatpush1.bf16.msra.mxu0 %v299
  %361 = vmatprep.subr.bf16.mxu0 0
  %362 = vmatpush1.bf16.msra.mxu0 %v300
  %363 = vmatprep.subr.bf16.mxu0 0
  %364 = vmatpush1.bf16.msra.mxu0 %v301
  %365 = vmatprep.subr.bf16.mxu0 0
  %366 = vmatpush1.bf16.msra.mxu0 %v302
  %367 = vmatprep.subr.bf16.mxu0 0
  %368 = vmatpush1.bf16.msra.mxu0 0
  %369 = vmatprep.subr.bf16.mxu0 0
  %370 = vmatpush1.bf16.msra.mxu0 0
  %371 = vmatprep.subr.bf16.mxu0 0
  %372 = vmatpush1.bf16.msra.mxu0 0
  %373 = vmatprep.subr.bf16.mxu0 0
  %374 = vmatpush1.bf16.msra.mxu0 0
  %375 = vmatprep.subr.bf16.mxu0 0
  %376 = vmatpush1.bf16.msra.mxu0 0
  %377 = vmatprep.subr.bf16.mxu0 0
  %378 = vmatpush1.bf16.msra.mxu0 0
  %379 = vmatprep.subr.bf16.mxu0 0
  %380 = vmatpush1.bf16.msra.mxu0 0
  %381 = vmatprep.subr.bf16.mxu0 0
  %382 = vmatpush1.bf16.msra.mxu0 0
  %383 = vmatprep.mubr.bf16.mxu0 0
  %384 = vmatmul.mubr.bf16.gmra.mrb[0].mxu0 %v335
  %v385 = vpop.f32.mrb[0].mxu0
  %v386 = vadd.f32 0.0, %v385
  %v387 = vpop.f32.mrb[0].mxu0
  %v388 = vpop.f32.mrb[0].mxu0
  %v389 = vadd.f32 0.0, %v388
  %v390 = vpop.f32.mrb[0].mxu0
  %391 = vmatprep.mubr.bf16.mxu0 0
  %392 = vmatmul.mubr.bf16.gmra.mrb[0].mxu0 %v336
  %v393 = vpop.f32.mrb[0].mxu0
  %v394 = vadd.f32 0.0, %v393
  %v395 = vpop.f32.mrb[0].mxu0
  %v396 = vpop.f32.mrb[0].mxu0
  %v397 = vadd.f32 0.0, %v396
  %v398 = vpop.f32.mrb[0].mxu0
  %399 = vmatprep.mubr.bf16.mxu0 0
  %400 = vmatmul.mubr.bf16.gmra.mrb[0].mxu0 %v337
  %v401 = vpop.f32.mrb[0].mxu0
  %v402 = vadd.f32 0.0, %v401
  %v403 = vpop.f32.mrb[0].mxu0
  %v404 = vpop.f32.mrb[0].mxu0
  %v405 = vadd.f32 0.0, %v404
  %v406 = vpop.f32.mrb[0].mxu0
  %407 = vmatprep.mubr.bf16.mxu0 0
  %408 = vmatmul.mubr.bf16.gmra.mrb[0].mxu0 %v338
  %v409 = vpop.f32.mrb[0].mxu0
  %v410 = vadd.f32 0.0, %v409
  %v411 = vpop.f32.mrb[0].mxu0
  %v412 = vpop.f32.mrb[0].mxu0
  %v413 = vadd.f32 0.0, %v412
  %v414 = vpop.f32.mrb[0].mxu0
  %415 = vmatprep.mubr.bf16.mxu0 0
  %416 = vmatmul.mubr.bf16.gmra.mrb[0].mxu0 %v339
  %v417 = vpop.f32.mrb[0].mxu0
  %v418 = vadd.f32 0.0, %v417
  %v419 = vpop.f32.mrb[0].mxu0
  %v420 = vpop.f32.mrb[0].mxu0
  %v421 = vadd.f32 0.0, %v420
  %v422 = vpop.f32.mrb[0].mxu0
  %423 = vmatprep.mubr.bf16.mxu0 0
  %424 = vmatmul.mubr.bf16.gmra.mrb[0].mxu0 %v340
  %v425 = vpop.f32.mrb[0].mxu0
  %v426 = vadd.f32 0.0, %v425
  %v427 = vpop.f32.mrb[0].mxu0
  %v428 = vpop.f32.mrb[0].mxu0
  %v429 = vadd.f32 0.0, %v428
  %v430 = vpop.f32.mrb[0].mxu0
  %431 = vmatprep.mubr.bf16.mxu0 0
  %432 = vmatmul.mubr.bf16.gmra.mrb[0].mxu0 %v341
  %v433 = vpop.f32.mrb[0].mxu0
  %v434 = vadd.f32 0.0, %v433
  %v435 = vpop.f32.mrb[0].mxu0
  %v436 = vpop.f32.mrb[0].mxu0
  %v437 = vadd.f32 0.0, %v436
  %v438 = vpop.f32.mrb[0].mxu0
  %439 = vmatprep.mubr.bf16.mxu0 0
  %440 = vmatmul.mubr.bf16.gmra.mrb[0].mxu0 %v342
  %v441 = vpop.f32.mrb[0].mxu0
  %v442 = vadd.f32 0.0, %v441
  %v443 = vpop.f32.mrb[0].mxu0
  %v444 = vpop.f32.mrb[0].mxu0
  %v445 = vadd.f32 0.0, %v444
  %v446 = vpop.f32.mrb[0].mxu0
  %447 = vdwg.mxu0
  %v448 = vadd.f32 %v263, %v386
  %v449 = vadd.f32 %v264, %v389
  %v450 = vadd.f32 %v265, %v394
  %v451 = vadd.f32 %v266, %v397
  %v452 = vadd.f32 %v267, %v402
  %v453 = vadd.f32 %v268, %v405
  %v454 = vadd.f32 %v269, %v410
  %v455 = vadd.f32 %v270, %v413
  %v456 = vadd.f32 %v271, %v418
  %v457 = vadd.f32 %v272, %v421
  %v458 = vadd.f32 %v273, %v426
  %v459 = vadd.f32 %v274, %v429
  %v460 = vadd.f32 %v275, %v434
  %v461 = vadd.f32 %v276, %v437
  %v462 = vadd.f32 %v277, %v442
  %v463 = vadd.f32 %v278, %v445
  %464 = vst [vmem:[#allocation2] sm:$0xff] %v448
  %465 = vst [vmem:[#allocation2 + $0x8] sm:$0xff] %v449
  %466 = vst [vmem:[#allocation2 + $0x10] sm:$0xff] %v450
  %467 = vst [vmem:[#allocation2 + $0x18] sm:$0xff] %v451
  %468 = vst [vmem:[#allocation2 + $0x20] sm:$0xff] %v452
  %469 = vst [vmem:[#allocation2 + $0x28] sm:$0xff] %v453
  %470 = vst [vmem:[#allocation2 + $0x30] sm:$0xff] %v454
  %471 = vst [vmem:[#allocation2 + $0x38] sm:$0xff] %v455
  %472 = vst [vmem:[#allocation2 + $0x40] sm:$0xff] %v456
  %473 = vst [vmem:[#allocation2 + $0x48] sm:$0xff] %v457
  %474 = vst [vmem:[#allocation2 + $0x50] sm:$0xff] %v458
  %475 = vst [vmem:[#allocation2 + $0x58] sm:$0xff] %v459
  %476 = vst [vmem:[#allocation2 + $0x60] sm:$0xff] %v460
  %477 = vst [vmem:[#allocation2 + $0x68] sm:$0xff] %v461
  %478 = vst [vmem:[#allocation2 + $0x70] sm:$0xff] %v462
  %479 = vst [vmem:[#allocation2 + $0x78] sm:$0xff] %v463
  // Predicated region
  $region22: #{mesh_gcn_forward.3} parent=0 // pred_check
    %p480 = pneg %p18
  $region23: #{mesh_gcn_forward.3} parent=0 // pred_check_branch
    %482 = sbr.rel (%p480) target = $region25
  $region24: #{mesh_gcn_forward.3} parent=0 // pred_region
    %v483 = vld [vmem:[#allocation2] sm:$0xff]
    %v484 = vld [vmem:[#allocation2 + $0x8] sm:$0xff]
    %v485 = vld [vmem:[#allocation2 + $0x10] sm:$0xff]
    %v486 = vld [vmem:[#allocation2 + $0x18] sm:$0xff]
    %v487 = vld [vmem:[#allocation2 + $0x20] sm:$0xff]
    %v488 = vld [vmem:[#allocation2 + $0x28] sm:$0xff]
    %v489 = vld [vmem:[#allocation2 + $0x30] sm:$0xff]
    %v490 = vld [vmem:[#allocation2 + $0x38] sm:$0xff]
    %v491 = vld [vmem:[#allocation2 + $0x40] sm:$0xff]
    %v492 = vld [vmem:[#allocation2 + $0x48] sm:$0xff]
    %v493 = vld [vmem:[#allocation2 + $0x50] sm:$0xff]
    %v494 = vld [vmem:[#allocation2 + $0x58] sm:$0xff]
    %v495 = vld [vmem:[#allocation2 + $0x60] sm:$0xff]
    %v496 = vld [vmem:[#allocation2 + $0x68] sm:$0xff]
    %v497 = vld [vmem:[#allocation2 + $0x70] sm:$0xff]
    %v498 = vld [vmem:[#allocation2 + $0x78] sm:$0xff]
    %v499 = vld [vmem:[%s3] sm:$0x1]
    %v501 = vlaneseq
    %v502 = vshrl.u32 %v501, 7
    %v503 = vsub.s32 0, %v502
    %v504 = vrot.slane %v499, %v503
    %v506 = vadd.f32 %v483, %v504
    %v507 = vadd.f32 %v484, %v504
    %v508 = vadd.f32 %v485, %v504
    %v509 = vadd.f32 %v486, %v504
    %v510 = vadd.f32 %v487, %v504
    %v511 = vadd.f32 %v488, %v504
    %v512 = vadd.f32 %v489, %v504
    %v513 = vadd.f32 %v490, %v504
    %v514 = vadd.f32 %v491, %v504
    %v515 = vadd.f32 %v492, %v504
    %v516 = vadd.f32 %v493, %v504
    %v517 = vadd.f32 %v494, %v504
    %v518 = vadd.f32 %v495, %v504
    %v519 = vadd.f32 %v496, %v504
    %v520 = vadd.f32 %v497, %v504
    %v521 = vadd.f32 %v498, %v504
    %522 = vst [vmem:[%s4] sm:$0xff] %v506
    %523 = vst [vmem:[%s4 + $0x8] sm:$0xff] %v507
    %524 = vst [vmem:[%s4 + $0x10] sm:$0xff] %v508
    %525 = vst [vmem:[%s4 + $0x18] sm:$0xff] %v509
    %526 = vst [vmem:[%s4 + $0x20] sm:$0xff] %v510
    %527 = vst [vmem:[%s4 + $0x28] sm:$0xff] %v511
    %528 = vst [vmem:[%s4 + $0x30] sm:$0xff] %v512
    %529 = vst [vmem:[%s4 + $0x38] sm:$0xff] %v513
    %530 = vst [vmem:[%s4 + $0x40] sm:$0xff] %v514
    %531 = vst [vmem:[%s4 + $0x48] sm:$0xff] %v515
    %532 = vst [vmem:[%s4 + $0x50] sm:$0xff] %v516
    %533 = vst [vmem:[%s4 + $0x58] sm:$0xff] %v517
    %534 = vst [vmem:[%s4 + $0x60] sm:$0xff] %v518
    %535 = vst [vmem:[%s4 + $0x68] sm:$0xff] %v519
    %536 = vst [vmem:[%s4 + $0x70] sm:$0xff] %v520
    %537 = vst [vmem:[%s4 + $0x78] sm:$0xff] %v521
  $region25: #{mesh_gcn_forward.3} parent=0 // pred_fallthru
    _
  // Predicated region
  $region26: #{mesh_gcn_forward.3} parent=0 // pred_check
    _
  $region27: #{mesh_gcn_forward.3} parent=0 // pred_check_branch
    %539 = sbr.rel (0) target = $region29
  $region28: #{mesh_gcn_forward.3} parent=0 // pred_region
    _
  $region29: #{mesh_gcn_forward.3} parent=0 // pred_fallthru
    _
  // Predicated region
  $region30: #{mesh_gcn_forward.3} parent=0 // pred_check
    _
  $region31: #{mesh_gcn_forward.3} parent=0 // pred_check_branch
    %541 = sbr.rel (0) target = $region33
  $region32: #{mesh_gcn_forward.3} parent=0 // pred_region
    _
  $region33: #{mesh_gcn_forward.3} parent=0 // pred_fallthru
    _

// kernel: mesh_gcn_forward.2
$region0: #{mesh_gcn_forward.2}
  #allocation0 [shape = 'u32[]', space=smem, size = 0x4, offset = 0x4, fixed_abs, tag = 'smem constant byte address 0x4 - core index']
  #allocation1 [shape = 'u32[144,128]{1,0:T(1,128)}', space=vmem, size = 0x12000, scoped, tag = 'internal scratch']
  #allocation2 [shape = 'f32[128,128]{1,0:T(8,128)}', space=vmem, size = 0x10000, scoped, tag = 'scratch operand']
  %s0 = inlined_call_operand.vmem [shape: bf16[128,128], index: 0, kind: input, shape index: {}]
  %s1 = inlined_call_operand.vmem [shape: bf16[128,128], index: 1, kind: input, shape index: {}]
  %s2 = inlined_call_operand.vmem [shape: bf16[128,128], index: 2, kind: input, shape index: {}]
  %s3 = inlined_call_operand.vmem [shape: f32[1,128], index: 3, kind: input, shape index: {}]
  %s4 = inlined_call_operand.vmem [shape: bf16[128,128], index: 4, kind: output, shape index: {}]
  %s5 = sld [smem:[#allocation0]]
  $region34: #{mesh_gcn_forward.2} parent=0
    _
  %s7 = ssub.s32 1, %s5
  %s8 = scalar_select 0, %s7, %s5
  // Predicated region
  $region2: #{mesh_gcn_forward.2} parent=0 // pred_check
    _
  $region3: #{mesh_gcn_forward.2} parent=0 // pred_check_branch
    %10 = sbr.rel (0) target = $region5
  $region4: #{mesh_gcn_forward.2} parent=0 // pred_region
    _
  $region5: #{mesh_gcn_forward.2} parent=0 // pred_fallthru
    _
  // Predicated region
  $region6: #{mesh_gcn_forward.2} parent=0 // pred_check
    _
  $region7: #{mesh_gcn_forward.2} parent=0 // pred_check_branch
    %12 = sbr.rel (0) target = $region9
  $region8: #{mesh_gcn_forward.2} parent=0 // pred_region
    _
  $region9: #{mesh_gcn_forward.2} parent=0 // pred_fallthru
    _
  // Predicated region
  $region10: #{mesh_gcn_forward.2} parent=0 // pred_check
    _
  $region11: #{mesh_gcn_forward.2} parent=0 // pred_check_branch
    %14 = sbr.rel (0) target = $region13
  $region12: #{mesh_gcn_forward.2} parent=0 // pred_region
    _
  $region13: #{mesh_gcn_forward.2} parent=0 // pred_fallthru
    _
  // Predicated region
  $region14: #{mesh_gcn_forward.2} parent=0 // pred_check
    _
  $region15: #{mesh_gcn_forward.2} parent=0 // pred_check_branch
    %16 = sbr.rel (0) target = $region17
  $region16: #{mesh_gcn_forward.2} parent=0 // pred_region
    _
  $region17: #{mesh_gcn_forward.2} parent=0 // pred_fallthru
    _
  %p18 = scmp.eq.s32.totalorder 0, 0
  // Predicated region
  $region18: #{mesh_gcn_forward.2} parent=0 // pred_check
    %p19 = pneg %p18
  $region19: #{mesh_gcn_forward.2} parent=0 // pred_check_branch
    %21 = sbr.rel (%p19) target = $region21
  $region20: #{mesh_gcn_forward.2} parent=0 // pred_region
    %22 = vst [vmem:[#allocation2] sm:$0xff] 0.0
    %23 = vst [vmem:[#allocation2 + $0x8] sm:$0xff] 0.0
    %24 = vst [vmem:[#allocation2 + $0x10] sm:$0xff] 0.0
    %25 = vst [vmem:[#allocation2 + $0x18] sm:$0xff] 0.0
    %26 = vst [vmem:[#allocation2 + $0x20] sm:$0xff] 0.0
    %27 = vst [vmem:[#allocation2 + $0x28] sm:$0xff] 0.0
    %28 = vst [vmem:[#allocation2 + $0x30] sm:$0xff] 0.0
    %29 = vst [vmem:[#allocation2 + $0x38] sm:$0xff] 0.0
    %30 = vst [vmem:[#allocation2 + $0x40] sm:$0xff] 0.0
    %31 = vst [vmem:[#allocation2 + $0x48] sm:$0xff] 0.0
    %32 = vst [vmem:[#allocation2 + $0x50] sm:$0xff] 0.0
    %33 = vst [vmem:[#allocation2 + $0x58] sm:$0xff] 0.0
    %34 = vst [vmem:[#allocation2 + $0x60] sm:$0xff] 0.0
    %35 = vst [vmem:[#allocation2 + $0x68] sm:$0xff] 0.0
    %36 = vst [vmem:[#allocation2 + $0x70] sm:$0xff] 0.0
    %37 = vst [vmem:[#allocation2 + $0x78] sm:$0xff] 0.0
  $region21: #{mesh_gcn_forward.2} parent=0 // pred_fallthru
    _
  %v38 = vld [vmem:[%s1] sm:$0xf]
  %v39 = vld [vmem:[%s1 + $0x4] sm:$0xf]
  %v40 = vld [vmem:[%s1 + $0x8] sm:$0xf]
  %v41 = vld [vmem:[%s1 + $0xc] sm:$0xf]
  %v42 = vld [vmem:[%s1 + $0x10] sm:$0xf]
  %v43 = vld [vmem:[%s1 + $0x14] sm:$0xf]
  %v44 = vld [vmem:[%s1 + $0x18] sm:$0xf]
  %v45 = vld [vmem:[%s1 + $0x1c] sm:$0xf]
  %v46 = vld [vmem:[%s1 + $0x20] sm:$0xf]
  %v47 = vld [vmem:[%s1 + $0x24] sm:$0xf]
  %v48 = vld [vmem:[%s1 + $0x28] sm:$0xf]
  %v49 = vld [vmem:[%s1 + $0x2c] sm:$0xf]
  %v50 = vld [vmem:[%s1 + $0x30] sm:$0xf]
  %v51 = vld [vmem:[%s1 + $0x34] sm:$0xf]
  %v52 = vld [vmem:[%s1 + $0x38] sm:$0xf]
  %v53 = vld [vmem:[%s1 + $0x3c] sm:$0xf]
  %v54 = vld [vmem:[%s2] sm:$0xf]
  %v55 = vld [vmem:[%s2 + $0x4] sm:$0xf]
  %v56 = vld [vmem:[%s2 + $0x8] sm:$0xf]
  %v57 = vld [vmem:[%s2 + $0xc] sm:$0xf]
  %v58 = vld [vmem:[%s2 + $0x10] sm:$0xf]
  %v59 = vld [vmem:[%s2 + $0x14] sm:$0xf]
  %v60 = vld [vmem:[%s2 + $0x18] sm:$0xf]
  %v61 = vld [vmem:[%s2 + $0x1c] sm:$0xf]
  %v62 = vld [vmem:[%s2 + $0x20] sm:$0xf]
  %v63 = vld [vmem:[%s2 + $0x24] sm:$0xf]
  %v64 = vld [vmem:[%s2 + $0x28] sm:$0xf]
  %v65 = vld [vmem:[%s2 + $0x2c] sm:$0xf]
  %v66 = vld [vmem:[%s2 + $0x30] sm:$0xf]
  %v67 = vld [vmem:[%s2 + $0x34] sm:$0xf]
  %v68 = vld [vmem:[%s2 + $0x38] sm:$0xf]
  %v69 = vld [vmem:[%s2 + $0x3c] sm:$0xf]
  %v86 = vunpack.c.l.b16 %v38
  %v87 = vunpack.c.l.b16 %v39
  %v88 = vunpack.c.l.b16 %v40
  %v89 = vunpack.c.l.b16 %v41
  %v90 = vunpack.c.l.b16 %v42
  %v91 = vunpack.c.l.b16 %v43
  %v92 = vunpack.c.l.b16 %v44
  %v93 = vunpack.c.l.b16 %v45
  %v94 = vunpack.c.l.b16 %v46
  %v95 = vunpack.c.l.b16 %v47
  %v96 = vunpack.c.l.b16 %v48
  %v97 = vunpack.c.l.b16 %v49
  %v98 = vunpack.c.l.b16 %v50
  %v99 = vunpack.c.l.b16 %v51
  %v100 = vunpack.c.l.b16 %v52
  %v101 = vunpack.c.l.b16 %v53
  %v102 = vpack.c.b16 %v87, %v86
  %v103 = vpack.c.b16 %v89, %v88
  %v104 = vpack.c.b16 %v91, %v90
  %v105 = vpack.c.b16 %v93, %v92
  %v106 = vpack.c.b16 %v95, %v94
  %v107 = vpack.c.b16 %v97, %v96
  %v108 = vpack.c.b16 %v99, %v98
  %v109 = vpack.c.b16 %v101, %v100
  %v134 = vunpack.c.l.b16 %v54
  %v135 = vunpack.c.l.b16 %v55
  %v136 = vunpack.c.l.b16 %v56
  %v137 = vunpack.c.l.b16 %v57
  %v138 = vunpack.c.l.b16 %v58
  %v139 = vunpack.c.l.b16 %v59
  %v140 = vunpack.c.l.b16 %v60
  %v141 = vunpack.c.l.b16 %v61
  %v142 = vunpack.c.l.b16 %v62
  %v143 = vunpack.c.l.b16 %v63
  %v144 = vunpack.c.l.b16 %v64
  %v145 = vunpack.c.l.b16 %v65
  %v146 = vunpack.c.l.b16 %v66
  %v147 = vunpack.c.l.b16 %v67
  %v148 = vunpack.c.l.b16 %v68
  %v149 = vunpack.c.l.b16 %v69
  %v150 = vpack.c.b16 %v135, %v134
  %v151 = vpack.c.b16 %v137, %v136
  %v152 = vpack.c.b16 %v139, %v138
  %v153 = vpack.c.b16 %v141, %v140
  %v154 = vpack.c.b16 %v143, %v142
  %v155 = vpack.c.b16 %v145, %v144
  %v156 = vpack.c.b16 %v147, %v146
  %v157 = vpack.c.b16 %v149, %v148
  %166 = vmatprep.subr.bf16.mxu0 0
  %167 = vmatpush1.bf16.msra.mxu0 %v150
  %168 = vmatprep.subr.bf16.mxu0 0
  %169 = vmatpush1.bf16.msra.mxu0 %v151
  %170 = vmatprep.subr.bf16.mxu0 0
  %171 = vmatpush1.bf16.msra.mxu0 %v152
  %172 = vmatprep.subr.bf16.mxu0 0
  %173 = vmatpush1.bf16.msra.mxu0 %v153
  %174 = vmatprep.subr.bf16.mxu0 0
  %175 = vmatpush1.bf16.msra.mxu0 %v154
  %176 = vmatprep.subr.bf16.mxu0 0
  %177 = vmatpush1.bf16.msra.mxu0 %v155
  %178 = vmatprep.subr.bf16.mxu0 0
  %179 = vmatpush1.bf16.msra.mxu0 %v156
  %180 = vmatprep.subr.bf16.mxu0 0
  %181 = vmatpush1.bf16.msra.mxu0 %v157
  %182 = vmatprep.subr.bf16.mxu0 0
  %183 = vmatpush1.bf16.msra.mxu0 0
  %184 = vmatprep.subr.bf16.mxu0 0
  %185 = vmatpush1.bf16.msra.mxu0 0
  %186 = vmatprep.subr.bf16.mxu0 0
  %187 = vmatpush1.bf16.msra.mxu0 0
  %188 = vmatprep.subr.bf16.mxu0 0
  %189 = vmatpush1.bf16.msra.mxu0 0
  %190 = vmatprep.subr.bf16.mxu0 0
  %191 = vmatpush1.bf16.msra.mxu0 0
  %192 = vmatprep.subr.bf16.mxu0 0
  %193 = vmatpush1.bf16.msra.mxu0 0
  %194 = vmatprep.subr.bf16.mxu0 0
  %195 = vmatpush1.bf16.msra.mxu0 0
  %196 = vmatprep.subr.bf16.mxu0 0
  %197 = vmatpush1.bf16.msra.mxu0 0
  %198 = vmatprep.mubr.bf16.mxu0 0
  %199 = vmatmul.mubr.bf16.gmra.mrb[0].mxu0 %v102
  %v200 = vpop.f32.mrb[0].mxu0
  %v201 = vadd.f32 0.0, %v200
  %v202 = vpop.f32.mrb[0].mxu0
  %v203 = vpop.f32.mrb[0].mxu0
  %v204 = vadd.f32 0.0, %v203
  %v205 = vpop.f32.mrb[0].mxu0
  %206 = vmatprep.mubr.bf16.mxu0 0
  %207 = vmatmul.mubr.bf16.gmra.mrb[0].mxu0 %v103
  %v208 = vpop.f32.mrb[0].mxu0
  %v209 = vadd.f32 0.0, %v208
  %v210 = vpop.f32.mrb[0].mxu0
  %v211 = vpop.f32.mrb[0].mxu0
  %v212 = vadd.f32 0.0, %v211
  %v213 = vpop.f32.mrb[0].mxu0
  %214 = vmatprep.mubr.bf16.mxu0 0
  %215 = vmatmul.mubr.bf16.gmra.mrb[0].mxu0 %v104
  %v216 = vpop.f32.mrb[0].mxu0
  %v217 = vadd.f32 0.0, %v216
  %v218 = vpop.f32.mrb[0].mxu0
  %v219 = vpop.f32.mrb[0].mxu0
  %v220 = vadd.f32 0.0, %v219
  %v221 = vpop.f32.mrb[0].mxu0
  %222 = vmatprep.mubr.bf16.mxu0 0
  %223 = vmatmul.mubr.bf16.gmra.mrb[0].mxu0 %v105
  %v224 = vpop.f32.mrb[0].mxu0
  %v225 = vadd.f32 0.0, %v224
  %v226 = vpop.f32.mrb[0].mxu0
  %v227 = vpop.f32.mrb[0].mxu0
  %v228 = vadd.f32 0.0, %v227
  %v229 = vpop.f32.mrb[0].mxu0
  %230 = vmatprep.mubr.bf16.mxu0 0
  %231 = vmatmul.mubr.bf16.gmra.mrb[0].mxu0 %v106
  %v232 = vpop.f32.mrb[0].mxu0
  %v233 = vadd.f32 0.0, %v232
  %v234 = vpop.f32.mrb[0].mxu0
  %v235 = vpop.f32.mrb[0].mxu0
  %v236 = vadd.f32 0.0, %v235
  %v237 = vpop.f32.mrb[0].mxu0
  %238 = vmatprep.mubr.bf16.mxu0 0
  %239 = vmatmul.mubr.bf16.gmra.mrb[0].mxu0 %v107
  %v240 = vpop.f32.mrb[0].mxu0
  %v241 = vadd.f32 0.0, %v240
  %v242 = vpop.f32.mrb[0].mxu0
  %v243 = vpop.f32.mrb[0].mxu0
  %v244 = vadd.f32 0.0, %v243
  %v245 = vpop.f32.mrb[0].mxu0
  %246 = vmatprep.mubr.bf16.mxu0 0
  %247 = vmatmul.mubr.bf16.gmra.mrb[0].mxu0 %v108
  %v248 = vpop.f32.mrb[0].mxu0
  %v249 = vadd.f32 0.0, %v248
  %v250 = vpop.f32.mrb[0].mxu0
  %v251 = vpop.f32.mrb[0].mxu0
  %v252 = vadd.f32 0.0, %v251
  %v253 = vpop.f32.mrb[0].mxu0
  %254 = vmatprep.mubr.bf16.mxu0 0
  %255 = vmatmul.mubr.bf16.gmra.mrb[0].mxu0 %v109
  %v256 = vpop.f32.mrb[0].mxu0
  %v257 = vadd.f32 0.0, %v256
  %v258 = vpop.f32.mrb[0].mxu0
  %v259 = vpop.f32.mrb[0].mxu0
  %v260 = vadd.f32 0.0, %v259
  %v261 = vpop.f32.mrb[0].mxu0
  %262 = vdwg.mxu0
  %v263 = vld [vmem:[#allocation2] sm:$0xff]
  %v264 = vld [vmem:[#allocation2 + $0x8] sm:$0xff]
  %v265 = vld [vmem:[#allocation2 + $0x10] sm:$0xff]
  %v266 = vld [vmem:[#allocation2 + $0x18] sm:$0xff]
  %v267 = vld [vmem:[#allocation2 + $0x20] sm:$0xff]
  %v268 = vld [vmem:[#allocation2 + $0x28] sm:$0xff]
  %v269 = vld [vmem:[#allocation2 + $0x30] sm:$0xff]
  %v270 = vld [vmem:[#allocation2 + $0x38] sm:$0xff]
  %v271 = vld [vmem:[#allocation2 + $0x40] sm:$0xff]
  %v272 = vld [vmem:[#allocation2 + $0x48] sm:$0xff]
  %v273 = vld [vmem:[#allocation2 + $0x50] sm:$0xff]
  %v274 = vld [vmem:[#allocation2 + $0x58] sm:$0xff]
  %v275 = vld [vmem:[#allocation2 + $0x60] sm:$0xff]
  %v276 = vld [vmem:[#allocation2 + $0x68] sm:$0xff]
  %v277 = vld [vmem:[#allocation2 + $0x70] sm:$0xff]
  %v278 = vld [vmem:[#allocation2 + $0x78] sm:$0xff]
  %v279 = vld [vmem:[%s0] sm:$0xf]
  %v280 = vld [vmem:[%s0 + $0x4] sm:$0xf]
  %v281 = vld [vmem:[%s0 + $0x8] sm:$0xf]
  %v282 = vld [vmem:[%s0 + $0xc] sm:$0xf]
  %v283 = vld [vmem:[%s0 + $0x10] sm:$0xf]
  %v284 = vld [vmem:[%s0 + $0x14] sm:$0xf]
  %v285 = vld [vmem:[%s0 + $0x18] sm:$0xf]
  %v286 = vld [vmem:[%s0 + $0x1c] sm:$0xf]
  %v287 = vld [vmem:[%s0 + $0x20] sm:$0xf]
  %v288 = vld [vmem:[%s0 + $0x24] sm:$0xf]
  %v289 = vld [vmem:[%s0 + $0x28] sm:$0xf]
  %v290 = vld [vmem:[%s0 + $0x2c] sm:$0xf]
  %v291 = vld [vmem:[%s0 + $0x30] sm:$0xf]
  %v292 = vld [vmem:[%s0 + $0x34] sm:$0xf]
  %v293 = vld [vmem:[%s0 + $0x38] sm:$0xf]
  %v294 = vld [vmem:[%s0 + $0x3c] sm:$0xf]
  %v295 = vpack.c.bf16 %v204, %v201
  %v296 = vpack.c.bf16 %v212, %v209
  %v297 = vpack.c.bf16 %v220, %v217
  %v298 = vpack.c.bf16 %v228, %v225
  %v299 = vpack.c.bf16 %v236, %v233
  %v300 = vpack.c.bf16 %v244, %v241
  %v301 = vpack.c.bf16 %v252, %v249
  %v302 = vpack.c.bf16 %v260, %v257
  %v319 = vunpack.c.l.b16 %v279
  %v320 = vunpack.c.l.b16 %v280
  %v321 = vunpack.c.l.b16 %v281
  %v322 = vunpack.c.l.b16 %v282
  %v323 = vunpack.c.l.b16 %v283
  %v324 = vunpack.c.l.b16 %v284
  %v325 = vunpack.c.l.b16 %v285
  %v326 = vunpack.c.l.b16 %v286
  %v327 = vunpack.c.l.b16 %v287
  %v328 = vunpack.c.l.b16 %v288
  %v329 = vunpack.c.l.b16 %v289
  %v330 = vunpack.c.l.b16 %v290
  %v331 = vunpack.c.l.b16 %v291
  %v332 = vunpack.c.l.b16 %v292
  %v333 = vunpack.c.l.b16 %v293
  %v334 = vunpack.c.l.b16 %v294
  %v335 = vpack.c.b16 %v320, %v319
  %v336 = vpack.c.b16 %v322, %v321
  %v337 = vpack.c.b16 %v324, %v323
  %v338 = vpack.c.b16 %v326, %v325
  %v339 = vpack.c.b16 %v328, %v327
  %v340 = vpack.c.b16 %v330, %v329
  %v341 = vpack.c.b16 %v332, %v331
  %v342 = vpack.c.b16 %v334, %v333
  %351 = vmatprep.subr.bf16.mxu0 0
  %352 = vmatpush1.bf16.msra.mxu0 %v295
  %353 = vmatprep.subr.bf16.mxu0 0
  %354 = vmatpush1.bf16.msra.mxu0 %v296
  %355 = vmatprep.subr.bf16.mxu0 0
  %356 = vmatpush1.bf16.msra.mxu0 %v297
  %357 = vmatprep.subr.bf16.mxu0 0
  %358 = vmatpush1.bf16.msra.mxu0 %v298
  %359 = vmatprep.subr.bf16.mxu0 0
  %360 = vmatpush1.bf16.msra.mxu0 %v299
  %361 = vmatprep.subr.bf16.mxu0 0
  %362 = vmatpush1.bf16.msra.mxu0 %v300
  %363 = vmatprep.subr.bf16.mxu0 0
  %364 = vmatpush1.bf16.msra.mxu0 %v301
  %365 = vmatprep.subr.bf16.mxu0 0
  %366 = vmatpush1.bf16.msra.mxu0 %v302
  %367 = vmatprep.subr.bf16.mxu0 0
  %368 = vmatpush1.bf16.msra.mxu0 0
  %369 = vmatprep.subr.bf16.mxu0 0
  %370 = vmatpush1.bf16.msra.mxu0 0
  %371 = vmatprep.subr.bf16.mxu0 0
  %372 = vmatpush1.bf16.msra.mxu0 0
  %373 = vmatprep.subr.bf16.mxu0 0
  %374 = vmatpush1.bf16.msra.mxu0 0
  %375 = vmatprep.subr.bf16.mxu0 0
  %376 = vmatpush1.bf16.msra.mxu0 0
  %377 = vmatprep.subr.bf16.mxu0 0
  %378 = vmatpush1.bf16.msra.mxu0 0
  %379 = vmatprep.subr.bf16.mxu0 0
  %380 = vmatpush1.bf16.msra.mxu0 0
  %381 = vmatprep.subr.bf16.mxu0 0
  %382 = vmatpush1.bf16.msra.mxu0 0
  %383 = vmatprep.mubr.bf16.mxu0 0
  %384 = vmatmul.mubr.bf16.gmra.mrb[0].mxu0 %v335
  %v385 = vpop.f32.mrb[0].mxu0
  %v386 = vadd.f32 0.0, %v385
  %v387 = vpop.f32.mrb[0].mxu0
  %v388 = vpop.f32.mrb[0].mxu0
  %v389 = vadd.f32 0.0, %v388
  %v390 = vpop.f32.mrb[0].mxu0
  %391 = vmatprep.mubr.bf16.mxu0 0
  %392 = vmatmul.mubr.bf16.gmra.mrb[0].mxu0 %v336
  %v393 = vpop.f32.mrb[0].mxu0
  %v394 = vadd.f32 0.0, %v393
  %v395 = vpop.f32.mrb[0].mxu0
  %v396 = vpop.f32.mrb[0].mxu0
  %v397 = vadd.f32 0.0, %v396
  %v398 = vpop.f32.mrb[0].mxu0
  %399 = vmatprep.mubr.bf16.mxu0 0
  %400 = vmatmul.mubr.bf16.gmra.mrb[0].mxu0 %v337
  %v401 = vpop.f32.mrb[0].mxu0
  %v402 = vadd.f32 0.0, %v401
  %v403 = vpop.f32.mrb[0].mxu0
  %v404 = vpop.f32.mrb[0].mxu0
  %v405 = vadd.f32 0.0, %v404
  %v406 = vpop.f32.mrb[0].mxu0
  %407 = vmatprep.mubr.bf16.mxu0 0
  %408 = vmatmul.mubr.bf16.gmra.mrb[0].mxu0 %v338
  %v409 = vpop.f32.mrb[0].mxu0
  %v410 = vadd.f32 0.0, %v409
  %v411 = vpop.f32.mrb[0].mxu0
  %v412 = vpop.f32.mrb[0].mxu0
  %v413 = vadd.f32 0.0, %v412
  %v414 = vpop.f32.mrb[0].mxu0
  %415 = vmatprep.mubr.bf16.mxu0 0
  %416 = vmatmul.mubr.bf16.gmra.mrb[0].mxu0 %v339
  %v417 = vpop.f32.mrb[0].mxu0
  %v418 = vadd.f32 0.0, %v417
  %v419 = vpop.f32.mrb[0].mxu0
  %v420 = vpop.f32.mrb[0].mxu0
  %v421 = vadd.f32 0.0, %v420
  %v422 = vpop.f32.mrb[0].mxu0
  %423 = vmatprep.mubr.bf16.mxu0 0
  %424 = vmatmul.mubr.bf16.gmra.mrb[0].mxu0 %v340
  %v425 = vpop.f32.mrb[0].mxu0
  %v426 = vadd.f32 0.0, %v425
  %v427 = vpop.f32.mrb[0].mxu0
  %v428 = vpop.f32.mrb[0].mxu0
  %v429 = vadd.f32 0.0, %v428
  %v430 = vpop.f32.mrb[0].mxu0
  %431 = vmatprep.mubr.bf16.mxu0 0
  %432 = vmatmul.mubr.bf16.gmra.mrb[0].mxu0 %v341
  %v433 = vpop.f32.mrb[0].mxu0
  %v434 = vadd.f32 0.0, %v433
  %v435 = vpop.f32.mrb[0].mxu0
  %v436 = vpop.f32.mrb[0].mxu0
  %v437 = vadd.f32 0.0, %v436
  %v438 = vpop.f32.mrb[0].mxu0
  %439 = vmatprep.mubr.bf16.mxu0 0
  %440 = vmatmul.mubr.bf16.gmra.mrb[0].mxu0 %v342
  %v441 = vpop.f32.mrb[0].mxu0
  %v442 = vadd.f32 0.0, %v441
  %v443 = vpop.f32.mrb[0].mxu0
  %v444 = vpop.f32.mrb[0].mxu0
  %v445 = vadd.f32 0.0, %v444
  %v446 = vpop.f32.mrb[0].mxu0
  %447 = vdwg.mxu0
  %v448 = vadd.f32 %v263, %v386
  %v449 = vadd.f32 %v264, %v389
  %v450 = vadd.f32 %v265, %v394
  %v451 = vadd.f32 %v266, %v397
  %v452 = vadd.f32 %v267, %v402
  %v453 = vadd.f32 %v268, %v405
  %v454 = vadd.f32 %v269, %v410
  %v455 = vadd.f32 %v270, %v413
  %v456 = vadd.f32 %v271, %v418
  %v457 = vadd.f32 %v272, %v421
  %v458 = vadd.f32 %v273, %v426
  %v459 = vadd.f32 %v274, %v429
  %v460 = vadd.f32 %v275, %v434
  %v461 = vadd.f32 %v276, %v437
  %v462 = vadd.f32 %v277, %v442
  %v463 = vadd.f32 %v278, %v445
  %464 = vst [vmem:[#allocation2] sm:$0xff] %v448
  %465 = vst [vmem:[#allocation2 + $0x8] sm:$0xff] %v449
  %466 = vst [vmem:[#allocation2 + $0x10] sm:$0xff] %v450
  %467 = vst [vmem:[#allocation2 + $0x18] sm:$0xff] %v451
  %468 = vst [vmem:[#allocation2 + $0x20] sm:$0xff] %v452
  %469 = vst [vmem:[#allocation2 + $0x28] sm:$0xff] %v453
  %470 = vst [vmem:[#allocation2 + $0x30] sm:$0xff] %v454
  %471 = vst [vmem:[#allocation2 + $0x38] sm:$0xff] %v455
  %472 = vst [vmem:[#allocation2 + $0x40] sm:$0xff] %v456
  %473 = vst [vmem:[#allocation2 + $0x48] sm:$0xff] %v457
  %474 = vst [vmem:[#allocation2 + $0x50] sm:$0xff] %v458
  %475 = vst [vmem:[#allocation2 + $0x58] sm:$0xff] %v459
  %476 = vst [vmem:[#allocation2 + $0x60] sm:$0xff] %v460
  %477 = vst [vmem:[#allocation2 + $0x68] sm:$0xff] %v461
  %478 = vst [vmem:[#allocation2 + $0x70] sm:$0xff] %v462
  %479 = vst [vmem:[#allocation2 + $0x78] sm:$0xff] %v463
  // Predicated region
  $region22: #{mesh_gcn_forward.2} parent=0 // pred_check
    %p480 = pneg %p18
  $region23: #{mesh_gcn_forward.2} parent=0 // pred_check_branch
    %482 = sbr.rel (%p480) target = $region25
  $region24: #{mesh_gcn_forward.2} parent=0 // pred_region
    %v483 = vld [vmem:[#allocation2] sm:$0xff]
    %v484 = vld [vmem:[#allocation2 + $0x8] sm:$0xff]
    %v485 = vld [vmem:[#allocation2 + $0x10] sm:$0xff]
    %v486 = vld [vmem:[#allocation2 + $0x18] sm:$0xff]
    %v487 = vld [vmem:[#allocation2 + $0x20] sm:$0xff]
    %v488 = vld [vmem:[#allocation2 + $0x28] sm:$0xff]
    %v489 = vld [vmem:[#allocation2 + $0x30] sm:$0xff]
    %v490 = vld [vmem:[#allocation2 + $0x38] sm:$0xff]
    %v491 = vld [vmem:[#allocation2 + $0x40] sm:$0xff]
    %v492 = vld [vmem:[#allocation2 + $0x48] sm:$0xff]
    %v493 = vld [vmem:[#allocation2 + $0x50] sm:$0xff]
    %v494 = vld [vmem:[#allocation2 + $0x58] sm:$0xff]
    %v495 = vld [vmem:[#allocation2 + $0x60] sm:$0xff]
    %v496 = vld [vmem:[#allocation2 + $0x68] sm:$0xff]
    %v497 = vld [vmem:[#allocation2 + $0x70] sm:$0xff]
    %v498 = vld [vmem:[#allocation2 + $0x78] sm:$0xff]
    %v499 = vld [vmem:[%s3] sm:$0x1]
    %v501 = vlaneseq
    %v502 = vshrl.u32 %v501, 7
    %v503 = vsub.s32 0, %v502
    %v504 = vrot.slane %v499, %v503
    %v506 = vadd.f32 %v483, %v504
    %v507 = vadd.f32 %v484, %v504
    %v508 = vadd.f32 %v485, %v504
    %v509 = vadd.f32 %v486, %v504
    %v510 = vadd.f32 %v487, %v504
    %v511 = vadd.f32 %v488, %v504
    %v512 = vadd.f32 %v489, %v504
    %v513 = vadd.f32 %v490, %v504
    %v514 = vadd.f32 %v491, %v504
    %v515 = vadd.f32 %v492, %v504
    %v516 = vadd.f32 %v493, %v504
    %v517 = vadd.f32 %v494, %v504
    %v518 = vadd.f32 %v495, %v504
    %v519 = vadd.f32 %v496, %v504
    %v520 = vadd.f32 %v497, %v504
    %v521 = vadd.f32 %v498, %v504
    %v522 = vmax.f32 %v506, 0.0
    %v523 = vmax.f32 %v507, 0.0
    %v524 = vmax.f32 %v508, 0.0
    %v525 = vmax.f32 %v509, 0.0
    %v526 = vmax.f32 %v510, 0.0
    %v527 = vmax.f32 %v511, 0.0
    %v528 = vmax.f32 %v512, 0.0
    %v529 = vmax.f32 %v513, 0.0
    %v530 = vmax.f32 %v514, 0.0
    %v531 = vmax.f32 %v515, 0.0
    %v532 = vmax.f32 %v516, 0.0
    %v533 = vmax.f32 %v517, 0.0
    %v534 = vmax.f32 %v518, 0.0
    %v535 = vmax.f32 %v519, 0.0
    %v536 = vmax.f32 %v520, 0.0
    %v537 = vmax.f32 %v521, 0.0
    %v538 = vpack.c.bf16 %v523, %v522
    %v539 = vpack.c.bf16 %v525, %v524
    %v540 = vpack.c.bf16 %v527, %v526
    %v541 = vpack.c.bf16 %v529, %v528
    %v542 = vpack.c.bf16 %v531, %v530
    %v543 = vpack.c.bf16 %v533, %v532
    %v544 = vpack.c.bf16 %v535, %v534
    %v545 = vpack.c.bf16 %v537, %v536
    %v554 = vunpack.c.l.b16 %v538
    %v555 = vunpack.c.h.b16 %v538
    %v556 = vunpack.c.l.b16 %v539
    %v557 = vunpack.c.h.b16 %v539
    %v558 = vunpack.c.l.b16 %v540
    %v559 = vunpack.c.h.b16 %v540
    %v560 = vunpack.c.l.b16 %v541
    %v561 = vunpack.c.h.b16 %v541
    %v562 = vunpack.c.l.b16 %v542
    %v563 = vunpack.c.h.b16 %v542
    %v564 = vunpack.c.l.b16 %v543
    %v565 = vunpack.c.h.b16 %v543
    %v566 = vunpack.c.l.b16 %v544
    %v567 = vunpack.c.h.b16 %v544
    %v568 = vunpack.c.l.b16 %v545
    %v569 = vunpack.c.h.b16 %v545
    %v570 = vpack.c.b16 %v554, %v554
    %v571 = vpack.c.b16 %v555, %v555
    %v572 = vpack.c.b16 %v556, %v556
    %v573 = vpack.c.b16 %v557, %v557
    %v574 = vpack.c.b16 %v558, %v558
    %v575 = vpack.c.b16 %v559, %v559
    %v576 = vpack.c.b16 %v560, %v560
    %v577 = vpack.c.b16 %v561, %v561
    %v578 = vpack.c.b16 %v562, %v562
    %v579 = vpack.c.b16 %v563, %v563
    %v580 = vpack.c.b16 %v564, %v564
    %v581 = vpack.c.b16 %v565, %v565
    %v582 = vpack.c.b16 %v566, %v566
    %v583 = vpack.c.b16 %v567, %v567
    %v584 = vpack.c.b16 %v568, %v568
    %v585 = vpack.c.b16 %v569, %v569
    %602 = vst [vmem:[%s4] sm:$0xf] %v570
    %603 = vst [vmem:[%s4 + $0x4] sm:$0xf] %v571
    %604 = vst [vmem:[%s4 + $0x8] sm:$0xf] %v572
    %605 = vst [vmem:[%s4 + $0xc] sm:$0xf] %v573
    %606 = vst [vmem:[%s4 + $0x10] sm:$0xf] %v574
    %607 = vst [vmem:[%s4 + $0x14] sm:$0xf] %v575
    %608 = vst [vmem:[%s4 + $0x18] sm:$0xf] %v576
    %609 = vst [vmem:[%s4 + $0x1c] sm:$0xf] %v577
    %610 = vst [vmem:[%s4 + $0x20] sm:$0xf] %v578
    %611 = vst [vmem:[%s4 + $0x24] sm:$0xf] %v579
    %612 = vst [vmem:[%s4 + $0x28] sm:$0xf] %v580
    %613 = vst [vmem:[%s4 + $0x2c] sm:$0xf] %v581
    %614 = vst [vmem:[%s4 + $0x30] sm:$0xf] %v582
    %615 = vst [vmem:[%s4 + $0x34] sm:$0xf] %v583
    %616 = vst [vmem:[%s4 + $0x38] sm:$0xf] %v584
    %617 = vst [vmem:[%s4 + $0x3c] sm:$0xf] %v585
  $region25: #{mesh_gcn_forward.2} parent=0 // pred_fallthru
    _
  // Predicated region
  $region26: #{mesh_gcn_forward.2} parent=0 // pred_check
    _
  $region27: #{mesh_gcn_forward.2} parent=0 // pred_check_branch
    %619 = sbr.rel (0) target = $region29
  $region28: #{mesh_gcn_forward.2} parent=0 // pred_region
    _
  $region29: #{mesh_gcn_forward.2} parent=0 // pred_fallthru
    _
  // Predicated region
  $region30: #{mesh_gcn_forward.2} parent=0 // pred_check
    _
  $region31: #{mesh_gcn_forward.2} parent=0 // pred_check_branch
    %621 = sbr.rel (0) target = $region33
  $region32: #{mesh_gcn_forward.2} parent=0 // pred_region
    _
  $region33: #{mesh_gcn_forward.2} parent=0 // pred_fallthru
    _

</llo_original>
